<compile_context>
chip_gen: v5e
topology: v5e:2x2
jax: 0.10.0
libtpu: 0.0.40
codegen_flags: <defaults>
</compile_context>

<pallas_src>
import functools

import jax
import jax.numpy as jnp
import numpy as np
from jax import lax
from jax.experimental import pallas as pl
from jax.experimental.pallas import tpu as pltpu

# q @ K^T style dimension numbers: contract the last dim of both operands.
_NT_DIMS = (((1,), (1,)), ((), ()))


# ---------------------------------------------------------------------------
# In-kernel helpers (traced inline)
# ---------------------------------------------------------------------------
def _softmax_last(scores, approx):
    """Numerically-stable softmax over the last (lane) axis of (1, T) scores."""
    smax = jnp.max(scores, axis=-1, keepdims=True)               # (1, 1)
    e = jnp.exp(scores - smax)                                    # (1, T)  EUP
    denom = jnp.sum(e, axis=-1, keepdims=True)                    # (1, 1)
    return e * pl.reciprocal(denom, approx=approx)                # EUP when approx


# ---------------------------------------------------------------------------
# Kernels (one grid step == one (call, batch) pair; all dots on the MXU)
# ---------------------------------------------------------------------------
def _attn_general_kernel(m_ref, x_ref, wt_ref, pool_ref, alpha_ref, *, approx):
    m = m_ref[0, 0]                                               # (T, Dm)
    x = x_ref[0, 0]                                               # (1, Dc)
    xw = jnp.dot(x, wt_ref[...], preferred_element_type=jnp.float32)        # (1, Dm)  MXU
    scores = lax.dot_general(xw, m, _NT_DIMS,
                             preferred_element_type=jnp.float32)             # (1, T)   MXU
    alpha = _softmax_last(scores, approx)
    pool_ref[0, 0] = jnp.dot(alpha, m, preferred_element_type=jnp.float32)   # (1, Dm)  MXU
    alpha_ref[0, 0] = alpha


def _attn_dot_kernel(m_ref, x_ref, pool_ref, alpha_ref, *, approx):
    m = m_ref[0, 0]                                               # (T, Dm)
    x = x_ref[0, 0]                                               # (1, Dm)
    scores = lax.dot_general(x, m, _NT_DIMS,
                             preferred_element_type=jnp.float32)             # (1, T)   MXU
    alpha = _softmax_last(scores, approx)
    pool_ref[0, 0] = jnp.dot(alpha, m, preferred_element_type=jnp.float32)   # (1, Dm)  MXU
    alpha_ref[0, 0] = alpha


def _attn_general2_kernel(m_ref, x_ref, wt_ref, b_ref, mask_ref,
                          pool_ref, alpha_ref, *, approx):
    m = m_ref[0, 0]                                               # (T, Dm)
    x = x_ref[0, 0]                                               # (1, Dc)
    msk = mask_ref[0, 0]                                          # (1, T)  pre-aligned, no transpose
    xw = jnp.dot(x, wt_ref[...], preferred_element_type=jnp.float32) + b_ref[...]
    s = lax.dot_general(xw, m, _NT_DIMS,
                        preferred_element_type=jnp.float32) * msk             # (1, T)  MXU
    # Folded normalisation: softmax(s)*mask renormalised == exp(s-max)*mask / sum(exp(s-max)*mask).
    smax = jnp.max(s, axis=-1, keepdims=True)
    num = jnp.exp(s - smax) * msk
    denom = jnp.sum(num, axis=-1, keepdims=True)
    alpha = num * pl.reciprocal(denom, approx=approx)             # all-zero mask row -> inf/NaN, same as torch
    pool_ref[0, 0] = jnp.dot(alpha, m, preferred_element_type=jnp.float32)    # (1, Dm)  MXU
    alpha_ref[0, 0] = alpha


# ---------------------------------------------------------------------------
# Wrappers
# ---------------------------------------------------------------------------
def matching_attention_batched(M, x, params=None, mask=None, att_type="general",
                               approx=True):
    """Run `num_calls` independent MatchingAttention forwards in ONE pallas_call.

    M    -> (num_calls, seq_len, batch, mem_dim)
    x    -> (num_calls, batch, cand_dim)
    mask -> (num_calls, batch, seq_len)           (general2 only)
    returns attn_pool (num_calls, batch, mem_dim), alpha (num_calls, batch, 1, seq_len)
    """
    N, T, B, Dm = M.shape
    Dc = x.shape[-1]

    # Wrapper-side layout plumbing (cheap XLA ops): batch-major M and an
    # explicit singleton "query" dim so every block's last-two dims equal the
    # full array dims.
    m_b = jnp.transpose(M.astype(jnp.float32), (0, 2, 1, 3))      # (N, B, T, Dm)
    x_q = x.astype(jnp.float32)[:, :, None, :]                    # (N, B, 1, Dc)

    grid = (N, B)
    m_spec = pl.BlockSpec((1, 1, T, Dm), lambda i, j: (i, j, 0, 0))
    x_spec = pl.BlockSpec((1, 1, 1, Dc), lambda i, j: (i, j, 0, 0))
    out_shape = (jax.ShapeDtypeStruct((N, B, 1, Dm), jnp.float32),
                 jax.ShapeDtypeStruct((N, B, 1, T), jnp.float32))
    out_specs = (pl.BlockSpec((1, 1, 1, Dm), lambda i, j: (i, j, 0, 0)),
                 pl.BlockSpec((1, 1, 1, T), lambda i, j: (i, j, 0, 0)))
    cparams = pltpu.CompilerParams(
        dimension_semantics=("parallel", "parallel"))             # v7x: grid split across both TCs

    has_transform = att_type in ("general", "general2")
    flops = N * B * (4 * T * Dm + 6 * T) + (N * B * 2 * Dc * Dm if has_transform else 0)
    transcendentals = N * B * T
    bytes_accessed = 4 * (N * B * T * Dm + N * B * Dc + N * B * Dm + N * B * T
                          + (Dc * Dm if has_transform else 0)
                          + (Dm if att_type == "general2" else 0)
                          + (N * B * T if att_type == "general2" else 0))
    cost = pl.CostEstimate(flops=flops, transcendentals=transcendentals,
                           bytes_accessed=bytes_accessed)

    if att_type == "general":
        w_t = params["w_t"].astype(jnp.float32)                   # (Dc, Dm), pre-transposed
        pool, alpha = pl.pallas_call(
            functools.partial(_attn_general_kernel, approx=approx),
            grid=grid,
            in_specs=[m_spec, x_spec,
                      pl.BlockSpec((Dc, Dm), lambda i, j: (0, 0))],
            out_specs=out_specs,
            out_shape=out_shape,
            compiler_params=cparams,
            cost_estimate=cost,
        )(m_b, x_q, w_t)
    elif att_type == "dot":
        assert Dm == Dc, "att_type='dot' requires mem_dim == cand_dim"
        pool, alpha = pl.pallas_call(
            functools.partial(_attn_dot_kernel, approx=approx),
            grid=grid,
            in_specs=[m_spec, x_spec],
            out_specs=out_specs,
            out_shape=out_shape,
            compiler_params=cparams,
            cost_estimate=cost,
        )(m_b, x_q)
    elif att_type == "general2":
        if mask is None:
            mask = jnp.ones((N, B, T), jnp.float32)
        mask_q = mask.astype(jnp.float32)[:, :, None, :]          # (N, B, 1, T), aligned with scores
        w_t = params["w_t"].astype(jnp.float32)                   # (Dc, Dm)
        b = params["b"].astype(jnp.float32)                       # (1, Dm)
        pool, alpha = pl.pallas_call(
            functools.partial(_attn_general2_kernel, approx=approx),
            grid=grid,
            in_specs=[m_spec, x_spec,
                      pl.BlockSpec((Dc, Dm), lambda i, j: (0, 0)),
                      pl.BlockSpec((1, Dm), lambda i, j: (0, 0)),
                      pl.BlockSpec((1, 1, 1, T), lambda i, j: (i, j, 0, 0))],
            out_specs=out_specs,
            out_shape=out_shape,
            compiler_params=cparams,
            cost_estimate=cost,
        )(m_b, x_q, w_t, b, mask_q)
    else:
        # TODO(synk): att_type='concat' (tanh-MLP scorer + vector_prod) not implemented in Pallas.
        raise NotImplementedError(att_type)

    return pool[:, :, 0, :], alpha                                # (N,B,Dm), (N,B,1,T)


def matching_attention(M, x, params=None, mask=None, att_type="general", approx=True):
    """Single-call forward: M (T,B,Dm), x (B,Dc), mask (B,T) -> (pool (B,Dm), alpha (B,1,T))."""
    maskb = None if mask is None else mask[None]
    pool, alpha = matching_attention_batched(M[None], x[None], params, maskb,
                                             att_type, approx)
    return pool[0], alpha[0]


# ---------------------------------------------------------------------------
# Parameter init (PyTorch nn.Linear default: uniform(-1/sqrt(in), 1/sqrt(in)))
# ---------------------------------------------------------------------------
def init_params(key, mem_dim, cand_dim):
    kw, kb = jax.random.split(key)
    bound = 1.0 / np.sqrt(cand_dim)
    w = jax.random.uniform(kw, (mem_dim, cand_dim), jnp.float32, -bound, bound)
    b = jax.random.uniform(kb, (mem_dim,), jnp.float32, -bound, bound)
    # Weight stored transposed (cand_dim, mem_dim) so the kernel does x @ W^T directly.
    return {"w_t": w.T, "b": b[None, :]}


# ---------------------------------------------------------------------------
# Pure-JAX references (correctness check only)
# ---------------------------------------------------------------------------
def _ref_general(M, x, w_t):
    xw = x @ w_t
    scores = jnp.einsum("bd,tbd->bt", xw, M)
    alpha = jax.nn.softmax(scores, axis=1)
    pool = jnp.einsum("bt,tbd->bd", alpha, M)
    return pool, alpha[:, None, :]


def _ref_dot(M, x):
    scores = jnp.einsum("bd,tbd->bt", x, M)
    alpha = jax.nn.softmax(scores, axis=1)
    pool = jnp.einsum("bt,tbd->bd", alpha, M)
    return pool, alpha[:, None, :]


def _ref_general2(M, x, w_t, b, mask):
    xw = x @ w_t + b
    scores = jnp.einsum("bd,tbd->bt", xw, M) * mask
    alpha_ = jax.nn.softmax(scores, axis=1) * mask
    alpha = alpha_ / jnp.sum(alpha_, axis=1, keepdims=True)
    pool = jnp.einsum("bt,tbd->bd", alpha, M)
    return pool, alpha[:, None, :]


# ---------------------------------------------------------------------------
if __name__ == "__main__":
    key = jax.random.PRNGKey(0)
    kp, km, kx, kn = jax.random.split(key, 4)

    SEQ, BATCH, MEM_DIM, CAND_DIM = 8, 2, 32, 32
    params = init_params(kp, MEM_DIM, CAND_DIM)

    M = jax.random.normal(km, (SEQ, BATCH, MEM_DIM), jnp.float32)
    x = jax.random.normal(kx, (BATCH, CAND_DIM), jnp.float32)
    mask = jnp.array([[1, 1, 1, 1, 1, 0, 0, 0],
                      [1, 1, 1, 1, 1, 1, 1, 0]], jnp.float32)      # (BATCH, SEQ)

    # --- exact-reciprocal path, tight comparison vs the XLA references ---
    pool_g, alpha_g = jax.block_until_ready(
        matching_attention(M, x, params, att_type="general", approx=False))
    rp, ra = _ref_general(M, x, params["w_t"])
    np.testing.assert_allclose(np.asarray(pool_g), np.asarray(rp), rtol=1e-4, atol=1e-4)
    np.testing.assert_allclose(np.asarray(alpha_g), np.asarray(ra), rtol=1e-4, atol=1e-4)

    pool_d, alpha_d = jax.block_until_ready(
        matching_attention(M, x, params, att_type="dot", approx=False))
    rp, ra = _ref_dot(M, x)
    np.testing.assert_allclose(np.asarray(pool_d), np.asarray(rp), rtol=1e-4, atol=1e-4)
    np.testing.assert_allclose(np.asarray(alpha_d), np.asarray(ra), rtol=1e-4, atol=1e-4)

    pool_2, alpha_2 = jax.block_until_ready(
        matching_attention(M, x, params, mask=mask, att_type="general2", approx=False))
    rp, ra = _ref_general2(M, x, params["w_t"], params["b"], mask)
    np.testing.assert_allclose(np.asarray(pool_2), np.asarray(rp), rtol=1e-4, atol=1e-4)
    np.testing.assert_allclose(np.asarray(alpha_2), np.asarray(ra), rtol=1e-4, atol=1e-4)

    # --- many calls fused into ONE gridded pallas_call (launch amortisation) ---
    N_CALLS = 3
    km2, kx2 = jax.random.split(kn)
    Ms = jax.random.normal(km2, (N_CALLS, SEQ, BATCH, MEM_DIM), jnp.float32)
    xs = jax.random.normal(kx2, (N_CALLS, BATCH, CAND_DIM), jnp.float32)
    masks = jnp.stack([mask, jnp.ones_like(mask), mask[:, ::-1]])  # (N, BATCH, SEQ)
    pools_b, alphas_b = jax.block_until_ready(
        matching_attention_batched(Ms, xs, params, masks, att_type="general2", approx=False))
    for n in range(N_CALLS):
        rp, ra = _ref_general2(Ms[n], xs[n], params["w_t"], params["b"], masks[n])
        np.testing.assert_allclose(np.asarray(pools_b[n]), np.asarray(rp), rtol=1e-4, atol=1e-4)
        np.testing.assert_allclose(np.asarray(alphas_b[n]), np.asarray(ra), rtol=1e-4, atol=1e-4)

    # --- default fast path (pl.reciprocal approx=True -> EUP), loose tolerance ---
    pool_a, alpha_a = jax.block_until_ready(
        matching_attention(M, x, params, att_type="general"))     # approx=True default
    rp, ra = _ref_general(M, x, params["w_t"])
    np.testing.assert_allclose(np.asarray(pool_a), np.asarray(rp), rtol=2e-2, atol=2e-2)
    np.testing.assert_allclose(np.asarray(alpha_a), np.asarray(ra), rtol=2e-2, atol=2e-2)

    print("KERNEL_OK")
</pallas_src>

<mosaic_0001>
module attributes {stable_mosaic.version = 11 : i64} {
  func.func @_attn_general_kernel(%arg0: i32, %arg1: i32, %arg2: memref<1x1x8x32xf32, #tpu.memory_space<vmem>>, %arg3: memref<1x1x1x32xf32, #tpu.memory_space<vmem>>, %arg4: memref<32x32xf32, #tpu.memory_space<vmem>>, %arg5: memref<1x1x1x32xf32, #tpu.memory_space<vmem>>, %arg6: memref<1x1x1x8xf32, #tpu.memory_space<vmem>>) attributes {dimension_semantics = [#tpu.dimension_semantics<parallel>, #tpu.dimension_semantics<parallel>], iteration_bounds = array<i64: 1, 2>, scalar_prefetch = 0 : i64, scratch_operands = 0 : i64, tpu.core_type = #tpu.core_type<tc>, window_params = [{transform_indices = @transform_0, window_bounds = array<i64: 1, 1, 8, 32>}, {transform_indices = @transform_1, window_bounds = array<i64: 1, 1, 1, 32>}, {pipeline_mode = #tpu.pipeline_mode<synchronous>, transform_indices = @transform_2, window_bounds = array<i64: 32, 32>}, {transform_indices = @transform_3, window_bounds = array<i64: 1, 1, 1, 32>}, {transform_indices = @transform_4, window_bounds = array<i64: 1, 1, 1, 8>}]} {
    %c0 = arith.constant 0 : index
    %c0_0 = arith.constant 0 : index
    %c0_1 = arith.constant 0 : index
    %c0_2 = arith.constant 0 : index
    %0 = vector.load %arg2[%c0, %c0_0, %c0_1, %c0_2] : memref<1x1x8x32xf32, #tpu.memory_space<vmem>>, vector<1x1x8x32xf32>
    %1 = vector.shape_cast %0 : vector<1x1x8x32xf32> to vector<8x32xf32>
    %c0_3 = arith.constant 0 : index
    %c0_4 = arith.constant 0 : index
    %c0_5 = arith.constant 0 : index
    %c0_6 = arith.constant 0 : index
    %2 = vector.load %arg3[%c0_3, %c0_4, %c0_5, %c0_6] : memref<1x1x1x32xf32, #tpu.memory_space<vmem>>, vector<1x1x1x32xf32>
    %3 = vector.shape_cast %2 : vector<1x1x1x32xf32> to vector<1x32xf32>
    %c0_7 = arith.constant 0 : index
    %c0_8 = arith.constant 0 : index
    %4 = vector.load %arg4[%c0_7, %c0_8] : memref<32x32xf32, #tpu.memory_space<vmem>>, vector<32x32xf32>
    %cst = arith.constant dense<0.000000e+00> : vector<1x32xf32>
    %5 = tpu.matmul %3, %4, %cst {dimension_numbers = #tpu.dot_dimension_numbers<[1], [0], [0], [1], [0, 0, 1, 1], [], []>} : vector<1x32xf32>, vector<32x32xf32>, vector<1x32xf32> -> vector<1x32xf32>
    %cst_9 = arith.constant dense<0.000000e+00> : vector<1x8xf32>
    %6 = tpu.matmul %5, %1, %cst_9 {dimension_numbers = #tpu.dot_dimension_numbers<[1], [1], [0], [0], [0, 0, 1, 0], [], []>} : vector<1x32xf32>, vector<8x32xf32>, vector<1x8xf32> -> vector<1x8xf32>
    %cst_10 = arith.constant dense<0xFF800000> : vector<1xf32>
    %7 = vector.multi_reduction <maximumf>, %6, %cst_10 [1] : vector<1x8xf32> to vector<1xf32>
    %8 = vector.shape_cast %7 : vector<1xf32> to vector<1x1xf32>
    %9 = vector.broadcast %8 : vector<1x1xf32> to vector<1x8xf32>
    %10 = arith.subf %6, %9 : vector<1x8xf32>
    %11 = math.exp %10 : vector<1x8xf32>
    %cst_11 = arith.constant dense<0.000000e+00> : vector<1xf32>
    %12 = vector.multi_reduction <add>, %11, %cst_11 [1] : vector<1x8xf32> to vector<1xf32>
    %13 = vector.shape_cast %12 : vector<1xf32> to vector<1x1xf32>
    %14 = tpu.reciprocal %13 : vector<1x1xf32> -> vector<1x1xf32>
    %15 = vector.broadcast %14 : vector<1x1xf32> to vector<1x8xf32>
    %16 = arith.mulf %11, %15 : vector<1x8xf32>
    %cst_12 = arith.constant dense<0.000000e+00> : vector<1x32xf32>
    %17 = tpu.matmul %16, %1, %cst_12 {dimension_numbers = #tpu.dot_dimension_numbers<[1], [0], [0], [1], [0, 0, 1, 1], [], []>} : vector<1x8xf32>, vector<8x32xf32>, vector<1x32xf32> -> vector<1x32xf32>
    %c0_13 = arith.constant 0 : index
    %c0_14 = arith.constant 0 : index
    %c0_15 = arith.constant 0 : index
    %c0_16 = arith.constant 0 : index
    %18 = vector.load %arg5[%c0_13, %c0_14, %c0_15, %c0_16] : memref<1x1x1x32xf32, #tpu.memory_space<vmem>>, vector<1x1x1x32xf32>
    %19 = vector.shape_cast %18 : vector<1x1x1x32xf32> to vector<1x32xf32>
    %20 = vector.shape_cast %17 : vector<1x32xf32> to vector<1x1x1x32xf32>
    tpu.vector_store %arg5[%c0_13, %c0_14, %c0_15, %c0_16], %20 {strides = array<i32>} : memref<1x1x1x32xf32, #tpu.memory_space<vmem>>, vector<1x1x1x32xf32>,
    %c0_17 = arith.constant 0 : index
    %c0_18 = arith.constant 0 : index
    %c0_19 = arith.constant 0 : index
    %c0_20 = arith.constant 0 : index
    %21 = vector.load %arg6[%c0_17, %c0_18, %c0_19, %c0_20] : memref<1x1x1x8xf32, #tpu.memory_space<vmem>>, vector<1x1x1x8xf32>
    %22 = vector.shape_cast %21 : vector<1x1x1x8xf32> to vector<1x8xf32>
    %23 = vector.shape_cast %16 : vector<1x8xf32> to vector<1x1x1x8xf32>
    tpu.vector_store %arg6[%c0_17, %c0_18, %c0_19, %c0_20], %23 {strides = array<i32>} : memref<1x1x1x8xf32, #tpu.memory_space<vmem>>, vector<1x1x1x8xf32>,
    return
  }
  func.func @transform_0(%arg0: i32, %arg1: i32) -> (i32, i32, i32, i32) {
    %c0_i32 = arith.constant 0 : i32
    %c0_i32_0 = arith.constant 0 : i32
    %c0_i32_1 = arith.constant 0 : i32
    return %arg0, %arg1, %c0_i32, %c0_i32_0 : i32, i32, i32, i32
  }
  func.func @transform_1(%arg0: i32, %arg1: i32) -> (i32, i32, i32, i32) {
    %c0_i32 = arith.constant 0 : i32
    %c0_i32_0 = arith.constant 0 : i32
    %c0_i32_1 = arith.constant 0 : i32
    return %arg0, %arg1, %c0_i32, %c0_i32_0 : i32, i32, i32, i32
  }
  func.func @transform_2(%arg0: i32, %arg1: i32) -> (i32, i32) {
    %c0_i32 = arith.constant 0 : i32
    %c0_i32_0 = arith.constant 0 : i32
    %c0_i32_1 = arith.constant 0 : i32
    return %c0_i32, %c0_i32_0 : i32, i32
  }
  func.func @transform_3(%arg0: i32, %arg1: i32) -> (i32, i32, i32, i32) {
    %c0_i32 = arith.constant 0 : i32
    %c0_i32_0 = arith.constant 0 : i32
    %c0_i32_1 = arith.constant 0 : i32
    return %arg0, %arg1, %c0_i32, %c0_i32_0 : i32, i32, i32, i32
  }
  func.func @transform_4(%arg0: i32, %arg1: i32) -> (i32, i32, i32, i32) {
    %c0_i32 = arith.constant 0 : i32
    %c0_i32_0 = arith.constant 0 : i32
    %c0_i32_1 = arith.constant 0 : i32
    return %arg0, %arg1, %c0_i32, %c0_i32_0 : i32, i32, i32, i32
  }
}

</mosaic_0001>

<llo_original>
// kernel: tpu_custom_call.1
$region0: #{tpu_custom_call.1}
  #allocation0 [shape = 'u32[]', space=smem, size = 0x4, offset = 0x4, fixed_abs, tag = 'smem constant byte address 0x4 - core index']
  #allocation1 [shape = 'u32[72,128]{1,0:T(1,128)}', space=vmem, size = 0x9000, scoped, tag = 'internal scratch']
  %s0 = inlined_call_operand.hbm [shape: f32[1,2,8,32], index: 0, kind: input, shape index: {}]
  %s1 = inlined_call_operand.hbm [shape: f32[1,2,1,32], index: 1, kind: input, shape index: {}]
  %s2 = inlined_call_operand.hbm [shape: f32[32,32], index: 2, kind: input, shape index: {}]
  %s3 = inlined_call_operand.hbm [shape: f32[1,2,1,32], index: 3, kind: output, shape index: {0}]
  %s4 = inlined_call_operand.hbm [shape: f32[1,2,1,8], index: 4, kind: output, shape index: {1}]
  %5 = xla_tuple %s3, %s4
  %s6 = sld [smem:[#allocation0]]
  $region65: #{tpu_custom_call.1} parent=0
    _
  %s8 = ssub.s32 1, %s6
  %s9 = scalar_select 0, %s8, %s6
  $region1: #{tpu_custom_call.1} parent=0
    #allocation2 [shape = 'u8[8192]{0}', space=vmem, size = 0x2000, scoped, tag = 'input window, operand 0']
    #allocation3 [shape = 's32[2]{0}', space=sflag, size = 0x8, scoped, tag = 'scoped memory for tpu_custom_call.1']
    #allocation4 [shape = 's32[2]{0}', space=sflag, size = 0x8, scoped, tag = 'scoped memory for tpu_custom_call.1']
    #allocation5 [shape = 'u8[1024]{0}', space=vmem, size = 0x400, scoped, tag = 'input window, operand 1']
    #allocation6 [shape = 's32[2]{0}', space=sflag, size = 0x8, scoped, tag = 'scoped memory for tpu_custom_call.1']
    #allocation7 [shape = 'u8[16384]{0}', space=vmem, size = 0x4000, scoped, tag = 'input window, operand 2, single buffered']
    #allocation8 [shape = 'u8[1024]{0}', space=vmem, size = 0x400, scoped, tag = 'output window, operand 0']
    #allocation9 [shape = 'u8[1024]{0}', space=vmem, size = 0x400, scoped, tag = 'output window, operand 1']
    #allocation10 [shape = 's32[2]{0}', space=sflag, size = 0x8, scoped, tag = 'scoped memory for tpu_custom_call.1']
    %10 = vsyncpa [#allocation3], 0
    %s11 = scalar_lea.sflag [#allocation3], 1
    %12 = vsyncpa %s11, 0
    %13 = vsyncpa [#allocation6], 0
    %s14 = scalar_lea.sflag [#allocation6], 1
    %15 = vsyncpa %s14, 0
    %16 = vsyncpa [#allocation4], 0
    %s17 = scalar_lea.sflag [#allocation4], 1
    %18 = vsyncpa %s17, 0
    %19 = vsyncpa [#allocation10], 0
    %s20 = scalar_lea.sflag [#allocation10], 1
    %21 = vsyncpa %s20, 0
    loop: start=0, step=1, limit=4
    $region2: #{tpu_custom_call.1} parent=1 // loop_pre_header
      _
    $region3: #{tpu_custom_call.1} parent=1 // loop_header
      %s23 = sphi 0, %s27
      %p24 = scmp.ge.s32.totalorder %s23, 4
      %s30 = sphi 0, %s42
      %s31 = sphi 0, %s38
      %s32 = sphi 0, %s30
      %s33 = sphi 0, %s31
      %s34 = sphi 0, %s32
      %s35 = sphi 0, %s33
      %s47 = sphi 0, %s49
      %s50 = sphi 0, %s47
      %s51 = sphi 0, %s50
      %s67 = sphi 0, %s51
      %s75 = sphi 0, %s77
      %s78 = sphi 0, %s75
      %s79 = sphi 0, %s78
      %s95 = sphi 0, %s79
      %s99 = sphi 0, %s99
      %s101 = sphi 0, %s99
      %s102 = sphi 0, %s101
      %s116 = sphi 0, %s102
      %s124 = sphi 0, %s126
      %s127 = sphi 0, %s124
      %s128 = sphi 0, %s127
      %s144 = sphi 0, %s128
      %s152 = sphi 0, %s154
      %s155 = sphi 0, %s152
      %s156 = sphi 0, %s155
      %s172 = sphi 0, %s156
    $region4: #{tpu_custom_call.1} parent=1 // loop_header_branch
      %26 = sbr.rel (%p24) target = $region8
    $region5: #{tpu_custom_call.1} parent=1 // loop_body
      %s28 = ssub.s32 %s23, 1
      %s29 = ssub.s32 %s23, 2
      %s36 = sadd.s32 1, %s31
      %p37 = scmp.ge.s32.totalorder %s36, 2
      %s38 = scalar_select %p37, 0, %s36
      %s39 = sadd.s32 1, %s30
      %s40 = scalar_select %p37, %s39, %s30
      %p41 = scmp.ge.s32.totalorder %s40, 1
      %s42 = scalar_select %p41, 0, %s40
      %s43 = ssub.s32 %s30, %s42
      %s44 = ssub.s32 %s31, %s38
      %s45 = sor.u32 %s43, %s44
      %p46 = scmp.eq.s32.totalorder %s45, 0
      %s48 = sadd.s32 %s47, 1
      %s49 = scalar_select %p46, %s47, %s48
      %p52 = pneg %p46
      %p53 = scmp.eq.s32.totalorder %s23, 1
      %p54 = por %p52, %p53
      %p55 = scmp.ne.s32.totalorder %s47, %s50
      %p56 = scmp.eq.s32.totalorder %s23, 0
      %p57 = por %p55, %p56
      %p58 = scmp.ne.s32.totalorder %s47, %s50
      %p59 = scmp.eq.s32.totalorder %s28, 1
      %p60 = por %p58, %p59
      %p61 = scmp.ne.s32.totalorder %s50, %s51
      %p62 = scmp.eq.s32.totalorder %s28, 0
      %p63 = por %p61, %p62
      %p64 = scmp.ne.s32.totalorder %s50, %s51
      %p65 = scmp.eq.s32.totalorder %s29, 1
      %p66 = por %p64, %p65
      %p68 = scmp.ne.s32.totalorder %s51, %s67
      %p69 = scmp.eq.s32.totalorder %s29, 0
      %p70 = por %p68, %p69
      %s71 = ssub.s32 %s30, %s42
      %s72 = ssub.s32 %s31, %s38
      %s73 = sor.u32 %s71, %s72
      %p74 = scmp.eq.s32.totalorder %s73, 0
      %s76 = sadd.s32 %s75, 1
      %s77 = scalar_select %p74, %s75, %s76
      %p80 = pneg %p74
      %p81 = scmp.eq.s32.totalorder %s23, 1
      %p82 = por %p80, %p81
      %p83 = scmp.ne.s32.totalorder %s75, %s78
      %p84 = scmp.eq.s32.totalorder %s23, 0
      %p85 = por %p83, %p84
      %p86 = scmp.ne.s32.totalorder %s75, %s78
      %p87 = scmp.eq.s32.totalorder %s28, 1
      %p88 = por %p86, %p87
      %p89 = scmp.ne.s32.totalorder %s78, %s79
      %p90 = scmp.eq.s32.totalorder %s28, 0
      %p91 = por %p89, %p90
      %p92 = scmp.ne.s32.totalorder %s78, %s79
      %p93 = scmp.eq.s32.totalorder %s29, 1
      %p94 = por %p92, %p93
      %p96 = scmp.ne.s32.totalorder %s79, %s95
      %p97 = scmp.eq.s32.totalorder %s29, 0
      %p98 = por %p96, %p97
      %s100 = sadd.s32 %s99, 1
      %p103 = scmp.eq.s32.totalorder %s23, 1
      %p104 = scmp.ne.s32.totalorder %s99, %s101
      %p105 = scmp.eq.s32.totalorder %s23, 0
      %p106 = por %p104, %p105
      %p107 = scmp.ne.s32.totalorder %s99, %s101
      %p108 = scmp.eq.s32.totalorder %s28, 1
      %p109 = por %p107, %p108
      %p110 = scmp.ne.s32.totalorder %s101, %s102
      %p111 = scmp.eq.s32.totalorder %s28, 0
      %p112 = por %p110, %p111
      %p113 = scmp.ne.s32.totalorder %s101, %s102
      %p114 = scmp.eq.s32.totalorder %s29, 1
      %p115 = por %p113, %p114
      %p117 = scmp.ne.s32.totalorder %s102, %s116
      %p118 = scmp.eq.s32.totalorder %s29, 0
      %p119 = por %p117, %p118
      %s120 = ssub.s32 %s30, %s42
      %s121 = ssub.s32 %s31, %s38
      %s122 = sor.u32 %s120, %s121
      %p123 = scmp.eq.s32.totalorder %s122, 0
      %s125 = sadd.s32 %s124, 1
      %s126 = scalar_select %p123, %s124, %s125
      %p129 = pneg %p123
      %p130 = scmp.eq.s32.totalorder %s23, 1
      %p131 = por %p129, %p130
      %p132 = scmp.ne.s32.totalorder %s124, %s127
      %p133 = scmp.eq.s32.totalorder %s23, 0
      %p134 = por %p132, %p133
      %p135 = scmp.ne.s32.totalorder %s124, %s127
      %p136 = scmp.eq.s32.totalorder %s28, 1
      %p137 = por %p135, %p136
      %p138 = scmp.ne.s32.totalorder %s127, %s128
      %p139 = scmp.eq.s32.totalorder %s28, 0
      %p140 = por %p138, %p139
      %p141 = scmp.ne.s32.totalorder %s127, %s128
      %p142 = scmp.eq.s32.totalorder %s29, 1
      %p143 = por %p141, %p142
      %p145 = scmp.ne.s32.totalorder %s128, %s144
      %p146 = scmp.eq.s32.totalorder %s29, 0
      %p147 = por %p145, %p146
      %s148 = ssub.s32 %s30, %s42
      %s149 = ssub.s32 %s31, %s38
      %s150 = sor.u32 %s148, %s149
      %p151 = scmp.eq.s32.totalorder %s150, 0
      %s153 = sadd.s32 %s152, 1
      %s154 = scalar_select %p151, %s152, %s153
      %p157 = pneg %p151
      %p158 = scmp.eq.s32.totalorder %s23, 1
      %p159 = por %p157, %p158
      %p160 = scmp.ne.s32.totalorder %s152, %s155
      %p161 = scmp.eq.s32.totalorder %s23, 0
      %p162 = por %p160, %p161
      %p163 = scmp.ne.s32.totalorder %s152, %s155
      %p164 = scmp.eq.s32.totalorder %s28, 1
      %p165 = por %p163, %p164
      %p166 = scmp.ne.s32.totalorder %s155, %s156
      %p167 = scmp.eq.s32.totalorder %s28, 0
      %p168 = por %p166, %p167
      %p169 = scmp.ne.s32.totalorder %s155, %s156
      %p170 = scmp.eq.s32.totalorder %s29, 1
      %p171 = por %p169, %p170
      %p173 = scmp.ne.s32.totalorder %s156, %s172
      %p174 = scmp.eq.s32.totalorder %s29, 0
      %p175 = por %p173, %p174
      %p176 = scmp.le.s32.totalorder 1, %s23
      %p177 = scmp.lt.s32.totalorder %s23, 3
      %p178 = pnand %p176, %p177
      %p179 = pneg %p178
      // Predicated region
      $region9: #{tpu_custom_call.1} parent=5 // pred_check
        _
      $region10: #{tpu_custom_call.1} parent=5 // pred_check_branch
        %181 = sbr.rel (%p178) target = $region12
      $region11: #{tpu_custom_call.1} parent=5 // pred_region
        %s182 = ssub.s32 %s23, 1
        // Predicated region
        $region13: #{tpu_custom_call.1} parent=11 // pred_check
          %p183 = pneg %p112
        $region14: #{tpu_custom_call.1} parent=11 // pred_check_branch
          %185 = sbr.rel (%p183) target = $region16
        $region15: #{tpu_custom_call.1} parent=11 // pred_region
          %187 = vsyncadd [#allocation6], 0
          %s188 = sshll.u32 %s2, 4
          %s189 = int_to_ptr.hbm [resolvable:$true] %s188
          %s190 = sshll.u32 [#allocation7], 4
          %s191 = int_to_ptr.vmem [resolvable:$true] %s190
          %196 = dma.hbm_to_vmem [thread:$0]  %s189, 512, %s191, [#allocation6], 128, 128, 8
        $region16: #{tpu_custom_call.1} parent=11 // pred_fallthru
          _
      $region12: #{tpu_custom_call.1} parent=5 // pred_fallthru
        _
      %p197 = scmp.lt.s32.totalorder %s23, 2
      // Predicated region
      $region17: #{tpu_custom_call.1} parent=5 // pred_check
        %p198 = pneg %p197
      $region18: #{tpu_custom_call.1} parent=5 // pred_check_branch
        %200 = sbr.rel (%p198) target = $region20
      $region19: #{tpu_custom_call.1} parent=5 // pred_region
        // Predicated region
        $region21: #{tpu_custom_call.1} parent=19 // pred_check
          %p201 = pneg %p57
        $region22: #{tpu_custom_call.1} parent=19 // pred_check_branch
          %203 = sbr.rel (%p201) target = $region24
        $region23: #{tpu_custom_call.1} parent=19 // pred_region
          %s204 = sand.u32 %s47, 1
          %s205 = scalar_lea.sflag [#allocation3], %s204
          %s206 = sand.u32 %s47, 1
          %s207 = smul.addr %s206, 8
          %s208 = scalar_lea.vmem [#allocation2], %s207
          %210 = vsyncadd %s205, 0
          %s211 = smul.addr %s30, 2
          %s212 = sadd.s32 %s31, %s211
          %s213 = smul.addr %s212, 8
          %s214 = scalar_lea.hbm %s0, %s213
          %s216 = sshll.u32 %s214, 4
          %s217 = int_to_ptr.hbm [resolvable:$true] %s216
          %s218 = sshll.u32 %s208, 4
          %s219 = int_to_ptr.vmem [resolvable:$true] %s218
          %221 = dma.hbm_to_vmem [thread:$0]  %s217, 128, %s219, %s205
        $region24: #{tpu_custom_call.1} parent=19 // pred_fallthru
          _
        // Predicated region
        $region25: #{tpu_custom_call.1} parent=19 // pred_check
          %p222 = pneg %p85
        $region26: #{tpu_custom_call.1} parent=19 // pred_check_branch
          %224 = sbr.rel (%p222) target = $region28
        $region27: #{tpu_custom_call.1} parent=19 // pred_region
          %s225 = sand.u32 %s23, 1
          %s226 = scalar_lea.sflag [#allocation6], %s225
          %s227 = sand.u32 %s75, 1
          %s228 = scalar_lea.vmem [#allocation5], %s227
          %230 = vsyncadd %s226, 0
          %s231 = smul.addr %s30, 2
          %s232 = sadd.s32 %s31, %s231
          %s233 = scalar_lea.hbm %s1, %s232
          %s235 = sshll.u32 %s233, 4
          %s236 = int_to_ptr.hbm [resolvable:$true] %s235
          %s237 = sshll.u32 %s228, 4
          %s238 = int_to_ptr.vmem [resolvable:$true] %s237
          %240 = dma.hbm_to_vmem [thread:$0]  %s236, 16, %s238, %s226
        $region28: #{tpu_custom_call.1} parent=19 // pred_fallthru
          _
      $region20: #{tpu_custom_call.1} parent=5 // pred_fallthru
        _
      %p241 = scmp.le.s32.totalorder 1, %s23
      %p242 = scmp.lt.s32.totalorder %s23, 3
      %p243 = pnand %p241, %p242
      %p244 = pneg %p243
      // Predicated region
      $region29: #{tpu_custom_call.1} parent=5 // pred_check
        _
      $region30: #{tpu_custom_call.1} parent=5 // pred_check_branch
        %246 = sbr.rel (%p243) target = $region32
      $region31: #{tpu_custom_call.1} parent=5 // pred_region
        %s247 = ssub.s32 %s23, 1
        %s248 = sand.u32 %s50, 1
        %s249 = scalar_lea.sflag [#allocation3], %s248
        %s250 = sand.u32 %s50, 1
        %s251 = smul.addr %s250, 8
        %s252 = scalar_lea.vmem [#allocation2], %s251
        // Predicated region
        $region33: #{tpu_custom_call.1} parent=31 // pred_check
          %p253 = pneg %p63
        $region34: #{tpu_custom_call.1} parent=31 // pred_check_branch
          %255 = sbr.rel (%p253) target = $region36
        $region35: #{tpu_custom_call.1} parent=31 // pred_region
          %257 = dma.done %s249, 128
        $region36: #{tpu_custom_call.1} parent=31 // pred_fallthru
          _
        %s258 = sand.u32 %s28, 1
        %s259 = scalar_lea.sflag [#allocation6], %s258
        %s260 = sand.u32 %s78, 1
        %s261 = scalar_lea.vmem [#allocation5], %s260
        // Predicated region
        $region37: #{tpu_custom_call.1} parent=31 // pred_check
          %p262 = pneg %p91
        $region38: #{tpu_custom_call.1} parent=31 // pred_check_branch
          %264 = sbr.rel (%p262) target = $region40
        $region39: #{tpu_custom_call.1} parent=31 // pred_region
          %266 = dma.done %s259, 16
        $region40: #{tpu_custom_call.1} parent=31 // pred_fallthru
          _
        // Predicated region
        $region41: #{tpu_custom_call.1} parent=31 // pred_check
          %p267 = pneg %p112
        $region42: #{tpu_custom_call.1} parent=31 // pred_check_branch
          %269 = sbr.rel (%p267) target = $region44
        $region43: #{tpu_custom_call.1} parent=31 // pred_region
          %271 = dma.done [#allocation6], 512
        $region44: #{tpu_custom_call.1} parent=31 // pred_fallthru
          _
        %s272 = sand.u32 %s50, 1
        %s273 = scalar_lea.sflag [#allocation3], %s272
        %s274 = sand.u32 %s50, 1
        %s275 = smul.addr %s274, 8
        %s276 = scalar_lea.vmem [#allocation2], %s275
        %p277 = pneg %p63
        %p278 = pneg %p60
        %s279 = sand.u32 %s28, 1
        %s280 = scalar_lea.sflag [#allocation6], %s279
        %s281 = sand.u32 %s78, 1
        %s282 = scalar_lea.vmem [#allocation5], %s281
        %p283 = pneg %p91
        %p284 = pneg %p88
        %p285 = pneg %p112
        %p286 = pneg %p109
        %p287 = pneg %p140
        %p288 = pneg %p137
        %s289 = sand.u32 %s127, 1
        %s290 = scalar_lea.sflag [#allocation4], %s289
        %s291 = sand.u32 %s127, 1
        %s292 = scalar_lea.vmem [#allocation8], %s291
        %p293 = pneg %p168
        %p294 = pneg %p165
        %s295 = sand.u32 %s155, 1
        %s296 = scalar_lea.sflag [#allocation10], %s295
        %s297 = sand.u32 %s155, 1
        %s298 = scalar_lea.vmem [#allocation9], %s297
        %v299 = vld [vmem:[%s252] sm:$0xff]
        %v300 = vld [vmem:[%s261] sm:$0x1]
        %v301 = vld [vmem:[#allocation7] sm:$0xff]
        %v302 = vld [vmem:[#allocation7 + $0x8] sm:$0xff]
        %v303 = vld [vmem:[#allocation7 + $0x10] sm:$0xff]
        %v304 = vld [vmem:[#allocation7 + $0x18] sm:$0xff]
        %vm305 = vcmask 261120
        %v307 = vsel %vm305, %v300, 0
        %309 = vmatpush.msra.mxu0 0.0
        %310 = vmatpush.msra.mxu0 0.0
        %311 = vmatpush.msra.mxu0 0.0
        %312 = vmatpush.msra.mxu0 0.0
        %313 = vmatpush.msra.mxu0 0.0
        %314 = vmatpush.msra.mxu0 0.0
        %315 = vmatpush.msra.mxu0 0.0
        %316 = vmatpush.msra.mxu0 0.0
        %317 = vmatpush.msra.mxu0 0.0
        %318 = vmatpush.msra.mxu0 0.0
        %319 = vmatpush.msra.mxu0 0.0
        %320 = vmatpush.msra.mxu0 0.0
        %321 = vmatpush.msra.mxu0 %v304
        %322 = vmatpush.msra.mxu0 %v303
        %323 = vmatpush.msra.mxu0 %v302
        %324 = vmatpush.msra.mxu0 %v301
        %325 = vmatmul.f32.gmra.mxu0 %v307
        %v326 = vpop.f32.mrf.mxu0
        %v327 = vadd.f32 0.0, %v326
        %328 = vdwg.mxu0
        %v330 = vsel %vm305, %v327, 0
        %v333 = vsel %vm305, %v299, 0
        %335 = vmatpush.xpose.msra.mxu0 0.0
        %336 = vmatpush.xpose.msra.mxu0 0.0
        %337 = vmatpush.xpose.msra.mxu0 0.0
        %338 = vmatpush.xpose.msra.mxu0 0.0
        %339 = vmatpush.xpose.msra.mxu0 0.0
        %340 = vmatpush.xpose.msra.mxu0 0.0
        %341 = vmatpush.xpose.msra.mxu0 0.0
        %342 = vmatpush.xpose.msra.mxu0 0.0
        %343 = vmatpush.xpose.msra.mxu0 0.0
        %344 = vmatpush.xpose.msra.mxu0 0.0
        %345 = vmatpush.xpose.msra.mxu0 0.0
        %346 = vmatpush.xpose.msra.mxu0 0.0
        %347 = vmatpush.xpose.msra.mxu0 0.0
        %348 = vmatpush.xpose.msra.mxu0 0.0
        %349 = vmatpush.xpose.msra.mxu0 0.0
        %350 = vmatpush.xpose.msra.mxu0 %v333
        %351 = vmatmul.f32.gmra.mxu0 %v330
        %v352 = vpop.f32.mrf.mxu0
        %v353 = vadd.f32 0.0, %v352
        %354 = vdwg.mxu0
        %vm355 = vcmask 57344
        %v356 = vsel %vm355, %v353, -inf
        %357 = vmax.xlane.f32.xlu0 %v356
        %v358 = vpop.xlane.xlu0 %357
        %v359 = vsub.f32 %v353, %v358
        %v360 = vmul.f32 %v359, 1.442695
        %v361 = vpow.pop %v360
        %v362 = vsel %vm355, %v361, 0.0
        %363 = vadd.xlane.f32.xlu0 %v362
        %v364 = vpop.xlane.xlu0 %363
        %v365 = vrcp.pop %v364
        %v366 = vmul.f32 %v364, %v365
        %v367 = vsub.f32 1.0, %v366
        %v368 = vmul.f32 %v365, %v367
        %v369 = vadd.f32 %v365, %v368
        %vm370 = vweird.f32 %v364
        %vm371 = vweird.f32 %v365
        %vm372 = vmor %vm370, %vm371
        %v373 = vsel %vm372, %v365, %v369
        %v374 = vand.u32 2147483647, %v364
        %vm375 = vcmp.eq.f32.partialorder %v374, 8.507059e+37
        %v376 = vand.u32 %v364, 2147483648
        %v377 = vor.u32 1.1754944e-38, %v376
        %v378 = vsel %vm375, %v377, %v373
        %v379 = vmul.f32 %v361, %v378
        %vm380 = vcmask 64512
        %v382 = vsel %vm380, %v379, 0
        %384 = vmatpush.msra.mxu0 0.0
        %385 = vmatpush.msra.mxu0 0.0
        %386 = vmatpush.msra.mxu0 0.0
        %387 = vmatpush.msra.mxu0 0.0
        %388 = vmatpush.msra.mxu0 0.0
        %389 = vmatpush.msra.mxu0 0.0
        %390 = vmatpush.msra.mxu0 0.0
        %391 = vmatpush.msra.mxu0 0.0
        %392 = vmatpush.msra.mxu0 0.0
        %393 = vmatpush.msra.mxu0 0.0
        %394 = vmatpush.msra.mxu0 0.0
        %395 = vmatpush.msra.mxu0 0.0
        %396 = vmatpush.msra.mxu0 0.0
        %397 = vmatpush.msra.mxu0 0.0
        %398 = vmatpush.msra.mxu0 0.0
        %399 = vmatpush.msra.mxu0 %v299
        %400 = vmatmul.f32.gmra.mxu0 %v382
        %v401 = vpop.f32.mrf.mxu0
        %v402 = vadd.f32 0.0, %v401
        %403 = vdwg.mxu0
        %vm404 = vcmask 253952
        %405 = vst.msk [vmem:[%s292] sm:$0x1] %vm404, %v402
        %406 = vst.msk [vmem:[%s298] sm:$0x1] %vm355, %v379
        %s407 = sand.u32 %s127, 1
        %s408 = scalar_lea.sflag [#allocation4], %s407
        %s409 = sand.u32 %s127, 1
        %s410 = scalar_lea.vmem [#allocation8], %s409
        %s411 = sand.u32 %s155, 1
        %s412 = scalar_lea.sflag [#allocation10], %s411
        %s413 = sand.u32 %s155, 1
        %s414 = scalar_lea.vmem [#allocation9], %s413
        // Predicated region
        $region45: #{tpu_custom_call.1} parent=31 // pred_check
          %p415 = pneg %p137
        $region46: #{tpu_custom_call.1} parent=31 // pred_check_branch
          %417 = sbr.rel (%p415) target = $region48
        $region47: #{tpu_custom_call.1} parent=31 // pred_region
          %419 = vsyncadd %s408, 0
          %s420 = smul.addr %s32, 2
          %s421 = sadd.s32 %s33, %s420
          %s422 = scalar_lea.hbm %s3, %s421
          %s424 = sshll.u32 %s410, 4
          %s425 = int_to_ptr.vmem [resolvable:$true] %s424
          %s426 = sshll.u32 %s422, 4
          %s427 = int_to_ptr.hbm [resolvable:$true] %s426
          %429 = dma.vmem_to_hbm [thread:$0]  %s425, 16, %s427, %s408
        $region48: #{tpu_custom_call.1} parent=31 // pred_fallthru
          _
        // Predicated region
        $region49: #{tpu_custom_call.1} parent=31 // pred_check
          %p430 = pneg %p165
        $region50: #{tpu_custom_call.1} parent=31 // pred_check_branch
          %432 = sbr.rel (%p430) target = $region52
        $region51: #{tpu_custom_call.1} parent=31 // pred_region
          %434 = vsyncadd %s412, 0
          %s435 = smul.addr %s32, 2
          %s436 = sadd.s32 %s33, %s435
          %s437 = scalar_lea.hbm %s4, %s436
          %s439 = sshll.u32 %s414, 4
          %s440 = int_to_ptr.vmem [resolvable:$true] %s439
          %s441 = sshll.u32 %s437, 4
          %s442 = int_to_ptr.hbm [resolvable:$true] %s441
          %444 = dma.vmem_to_hbm [thread:$0]  %s440, 16, %s442, %s412
        $region52: #{tpu_custom_call.1} parent=31 // pred_fallthru
          _
      $region32: #{tpu_custom_call.1} parent=5 // pred_fallthru
        _
      %p445 = scmp.le.s32.totalorder 2, %s23
      // Predicated region
      $region53: #{tpu_custom_call.1} parent=5 // pred_check
        %p446 = pneg %p445
      $region54: #{tpu_custom_call.1} parent=5 // pred_check_branch
        %448 = sbr.rel (%p446) target = $region56
      $region55: #{tpu_custom_call.1} parent=5 // pred_region
        %s449 = ssub.s32 %s23, 2
        // Predicated region
        $region57: #{tpu_custom_call.1} parent=55 // pred_check
          %p450 = pneg %p143
        $region58: #{tpu_custom_call.1} parent=55 // pred_check_branch
          %452 = sbr.rel (%p450) target = $region60
        $region59: #{tpu_custom_call.1} parent=55 // pred_region
          %s453 = sand.u32 %s128, 1
          %s454 = scalar_lea.sflag [#allocation4], %s453
          %s455 = sand.u32 %s128, 1
          %s456 = scalar_lea.vmem [#allocation8], %s455
          %458 = dma.done %s454, 16
        $region60: #{tpu_custom_call.1} parent=55 // pred_fallthru
          _
        // Predicated region
        $region61: #{tpu_custom_call.1} parent=55 // pred_check
          %p459 = pneg %p171
        $region62: #{tpu_custom_call.1} parent=55 // pred_check_branch
          %461 = sbr.rel (%p459) target = $region64
        $region63: #{tpu_custom_call.1} parent=55 // pred_region
          %s462 = sand.u32 %s156, 1
          %s463 = scalar_lea.sflag [#allocation10], %s462
          %s464 = sand.u32 %s156, 1
          %s465 = scalar_lea.vmem [#allocation9], %s464
          %467 = dma.done %s463, 16
        $region64: #{tpu_custom_call.1} parent=55 // pred_fallthru
          _
      $region56: #{tpu_custom_call.1} parent=5 // pred_fallthru
        _
    $region6: #{tpu_custom_call.1} parent=1 // loop_footer
      %s27 = sadd.s32 1, %s23
    $region7: #{tpu_custom_call.1} parent=1 // loop_footer_branch
      %22 = sbr.rel target = $region3
    $region8: #{tpu_custom_call.1} parent=1 // loop_exit
      _
    %468 = vsyncpa [#allocation3], 1
    %s469 = scalar_lea.sflag [#allocation3], 1
    %470 = vsyncpa %s469, 1
    %471 = vsyncpa [#allocation6], 1
    %s472 = scalar_lea.sflag [#allocation6], 1
    %473 = vsyncpa %s472, 1
    %474 = vsyncpa [#allocation4], 1
    %s475 = scalar_lea.sflag [#allocation4], 1
    %476 = vsyncpa %s475, 1
    %477 = vsyncpa [#allocation10], 1
    %s478 = scalar_lea.sflag [#allocation10], 1
    %479 = vsyncpa %s478, 1

</llo_original>
